<compile_context>
chip_gen: v7x
topology: tpu7x:2x2x1
jax: 0.10.0
libtpu: 0.0.40
codegen_flags: <defaults>
</compile_context>

<pallas_src>
import math

import jax
import jax.numpy as jnp
from jax.experimental import pallas as pl
from jax.experimental.pallas import tpu as pltpu

_LANE = 128
_MAX_LANE_UNITS = 16          # search cols in {128, 256, ..., 2048}


# ----------------------------------------------------------------------------
# Kernels
# ----------------------------------------------------------------------------
def _drop_path_kernel(mask_ref, x_ref, o_ref):
    # mask_ref: (B,) int32 keep flags in SMEM (scalar prefetch).
    # x_ref / o_ref: (1, tile_rows, cols) lane/sublane-dense activation block.
    keep = mask_ref[pl.program_id(0)].astype(x_ref.dtype)
    o_ref[...] = x_ref[...] * keep


def _drop_path_add_kernel(mask_ref, res_ref, x_ref, o_ref):
    # Fused residual add:  out = residual + keep * x  (one HBM pass).
    keep = mask_ref[pl.program_id(0)].astype(x_ref.dtype)
    o_ref[...] = res_ref[...] + x_ref[...] * keep


# ----------------------------------------------------------------------------
# Layout / tiling selection
# ----------------------------------------------------------------------------
def _is_v7x() -> bool:
    try:
        return "v7" in jax.devices()[0].device_kind.lower()
    except Exception:  # pragma: no cover - defensive
        return False


def _default_target_block_bytes(n_streams: int) -> int:
    # Total double-buffered working budget: ~32 MiB on v7x (3.2 TB/s HBM makes
    # per-step overhead visible), ~16 MiB on v5e/v6e (4 MiB blocks already hit
    # 85%+ of roofline there).
    budget = (32 if _is_v7x() else 16) * 1024 * 1024
    return max(512 * 1024, budget // (2 * n_streams))


def _choose_layout(n_feat: int, itemsize: int, batch: int,
                   target_block_bytes: int):
    """Pick (rows, cols, pad, tile_rows, grid_r) for one sample's features."""
    # Dtype-native sublane multiple: 8 for f32, 16 for bf16, 32 for int8/fp8.
    sublane = max(8, 32 // itemsize)

    # 1) Prefer an exact factorization n_feat == rows*cols with cols a lane
    #    multiple and rows a sublane multiple -> zero padding / extra copies.
    cols = None
    rows = 0
    for units in range(_MAX_LANE_UNITS, 0, -1):          # 2048 ... 128
        c = units * _LANE
        if n_feat % (c * sublane) == 0:
            cols = c
            rows = n_feat // c
            break
    if cols is None:
        # 2) Fallback: padded slab.  Pick cols minimizing padded elements
        #    (ties prefer wider cols for wider unmasked stores).
        best = None
        for units in range(1, _MAX_LANE_UNITS + 1):
            c = units * _LANE
            r = -(-n_feat // c)                           # ceil
            r = -(-r // sublane) * sublane                # round to sublane
            if best is None or r * c <= best[0]:
                best = (r * c, r, c)
        _, rows, cols = best
    pad = rows * cols - n_feat

    # Tile rows: biggest sublane-multiple block <= target_block_bytes.  No
    # "must divide rows" requirement: the grid uses cdiv and Pallas masks the
    # ragged last block (its OOB writes are discarded).
    r_units = rows // sublane
    max_t = max(1, target_block_bytes // (sublane * cols * itemsize))
    t_units = min(r_units, max_t)
    grid_r = -(-r_units // t_units)

    # v7x megacore: keep total grid points even so both TensorCores get work
    # (best effort; one extra ~0.35us step at most on single-TC chips).
    if (batch * grid_r) % 2 == 1 and r_units >= 2:
        t_units = -(-r_units // (grid_r + 1))
        grid_r = -(-r_units // t_units)

    return rows, cols, pad, t_units * sublane, grid_r


# ----------------------------------------------------------------------------
# pallas_call wrapper (shared by plain and fused variants)
# ----------------------------------------------------------------------------
def _stochastic_depth_call(mask, x, residual=None, target_block_bytes=None,
                           donate_x: bool = False):
    B = x.shape[0]
    N = math.prod(x.shape[1:])
    itemsize = jnp.dtype(x.dtype).itemsize
    n_streams = 2 if residual is None else 3              # blocked ins + out
    if target_block_bytes is None:
        target_block_bytes = _default_target_block_bytes(n_streams)

    rows, cols, pad, tile_rows, grid_r = _choose_layout(
        N, itemsize, B, target_block_bytes)

    def to_slab(a):
        a = a.reshape(B, N)
        if pad:
            # Only reachable when N has no (sublane*128)-aligned factorization;
            # costs one extra HBM round trip on that (rare) path.
            a = jnp.pad(a, ((0, 0), (0, pad)))
        return a.reshape(B, rows, cols)

    block = (1, tile_rows, cols)
    idx = lambda b, r, mask_ref: (b, r, 0)   # prefetch ref is a trailing arg
    spec = pl.BlockSpec(block, idx)

    if residual is None:
        kernel = _drop_path_kernel
        operands = (mask, to_slab(x))
        in_specs = [spec]
    else:
        kernel = _drop_path_add_kernel
        operands = (mask, to_slab(residual), to_slab(x))
        in_specs = [spec, spec]

    # Double-buffered working set + headroom; cap at 48 MiB so v7x's 64 MiB
    # physical VMEM keeps room for Mosaic internal scratch.
    block_bytes = tile_rows * cols * itemsize
    vmem_bytes = int(min(48 * 1024 * 1024,
                         max(16 * 1024 * 1024,
                             2 * n_streams * block_bytes + 4 * 1024 * 1024)))

    # Donate x's HBM buffer into the output when the caller allows it.
    io_aliases = {len(operands) - 1: 0} if donate_x else {}

    out3 = pl.pallas_call(
        kernel,
        out_shape=jax.ShapeDtypeStruct((B, rows, cols), x.dtype),
        grid_spec=pltpu.PrefetchScalarGridSpec(
            num_scalar_prefetch=1,
            grid=(B, grid_r),
            in_specs=in_specs,
            out_specs=pl.BlockSpec(block, idx),
        ),
        input_output_aliases=io_aliases,
        compiler_params=pltpu.CompilerParams(
            dimension_semantics=("parallel", "parallel"),
            vmem_limit_bytes=vmem_bytes),
    )(*operands)

    out_flat = out3.reshape(B, rows * cols)
    if pad:
        out_flat = out_flat[:, :N]
    return out_flat.reshape(x.shape)


# ----------------------------------------------------------------------------
# Public API
# ----------------------------------------------------------------------------
def drop_path(x, key, drop_prob: float = 0.0, scale_by_keep: bool = True,
              training: bool = True, target_block_bytes=None,
              donate_x: bool = False):
    """Pallas DropPath. `x` is NCHW (or any rank >= 1 with batch first).

    Mirrors the reference module exactly: multiplies by a raw 0/1 bernoulli
    mask (no 1/keep_prob rescale), and returns None when scale_by_keep=False.
    """
    if drop_prob == 0.0 or not training:
        return x
    keep_prob = 1.0 - drop_prob
    if not (keep_prob > 0.0 and scale_by_keep):
        # Mirrors the reference forward, which falls off the end here.
        return None
    mask = jax.random.bernoulli(key, p=keep_prob,
                                shape=(x.shape[0],)).astype(jnp.int32)
    return _stochastic_depth_call(mask, x, residual=None,
                                  target_block_bytes=target_block_bytes,
                                  donate_x=donate_x)


def drop_path_add(residual, x, key, drop_prob: float = 0.0,
                  scale_by_keep: bool = True, training: bool = True,
                  target_block_bytes=None, donate_x: bool = False):
    """Fused `residual + drop_path(x)` — one HBM pass instead of two ops."""
    if drop_prob == 0.0 or not training:
        return residual + x
    keep_prob = 1.0 - drop_prob
    if not (keep_prob > 0.0 and scale_by_keep):
        return None
    mask = jax.random.bernoulli(key, p=keep_prob,
                                shape=(x.shape[0],)).astype(jnp.int32)
    return _stochastic_depth_call(mask, x, residual=residual,
                                  target_block_bytes=target_block_bytes,
                                  donate_x=donate_x)


# ----------------------------------------------------------------------------
# Self-test
# ----------------------------------------------------------------------------
if __name__ == "__main__":
    key = jax.random.PRNGKey(0)
    k_x, k_mask, k_x2, k_res, k_bf = jax.random.split(key, 5)

    drop_prob = 0.25
    keep_prob = 1.0 - drop_prob

    # Pure-JAX reference mask (same key / shape draw as inside drop_path).
    ref_mask2 = jax.random.bernoulli(k_mask, p=keep_prob, shape=(2,)).astype(
        jnp.float32).reshape(2, 1, 1, 1)

    # 1) Small NCHW input; N=1024 factorizes exactly (cols=128, rows=8).
    x = jax.random.normal(k_x, (2, 4, 16, 16), dtype=jnp.float32)
    out = jax.block_until_ready(
        drop_path(x, k_mask, drop_prob=drop_prob, scale_by_keep=True,
                  training=True))
    ref = x * ref_mask2
    assert jnp.array_equal(out, ref), "mismatch vs reference (exact path)"

    # 2) Feature count with no aligned factorization: exercises padded path.
    x2 = jax.random.normal(k_x2, (2, 3, 7, 5), dtype=jnp.float32)
    out2 = jax.block_until_ready(
        drop_path(x2, k_mask, drop_prob=drop_prob, training=True))
    ref2 = x2 * ref_mask2
    assert jnp.array_equal(out2, ref2), "mismatch vs reference (padded path)"

    # 3) bf16 path (dtype-native sublane = 16).
    xb = jax.random.normal(k_bf, (2, 8, 16, 16), dtype=jnp.float32
                           ).astype(jnp.bfloat16)
    outb = jax.block_until_ready(
        drop_path(xb, k_mask, drop_prob=drop_prob, training=True))
    refb = xb * ref_mask2.astype(jnp.bfloat16)
    assert jnp.array_equal(outb, refb), "mismatch vs reference (bf16 path)"

    # 4) Fused residual variant: residual + keep * x.
    res = jax.random.normal(k_res, (2, 4, 16, 16), dtype=jnp.float32)
    out_f = jax.block_until_ready(
        drop_path_add(res, x, k_mask, drop_prob=drop_prob, training=True))
    ref_f = res + x * ref_mask2
    assert jnp.allclose(out_f, ref_f, rtol=0.0, atol=0.0), \
        "mismatch vs reference (fused residual path)"

    # 5) Donated-input path (input_output_aliases).
    out_d = jax.block_until_ready(
        drop_path(x, k_mask, drop_prob=drop_prob, training=True,
                  donate_x=True))
    assert jnp.array_equal(out_d, ref), "mismatch vs reference (donated path)"

    # 6) Eval-mode / drop_prob==0 paths are identity; scale_by_keep=False
    #    mirrors the reference's fall-off-the-end (None) behavior.
    assert drop_path(x, k_mask, drop_prob=drop_prob, training=False) is x
    assert drop_path(x, k_mask, drop_prob=0.0, training=True) is x
    assert drop_path(x, k_mask, drop_prob=drop_prob, scale_by_keep=False,
                     training=True) is None

    print("KERNEL_OK")
</pallas_src>

<mosaic_0001>
module attributes {stable_mosaic.version = 11 : i64} {
  func.func @_drop_path_kernel(%arg0: i32, %arg1: i32, %arg2: memref<2xi32, #tpu.memory_space<smem>>, %arg3: memref<1x8x128xf32, #tpu.memory_space<vmem>>, %arg4: memref<1x8x128xf32, #tpu.memory_space<vmem>>) attributes {dimension_semantics = [#tpu.dimension_semantics<parallel>, #tpu.dimension_semantics<parallel>], iteration_bounds = array<i64: 2, 1>, scalar_prefetch = 1 : i64, scratch_operands = 0 : i64, tpu.core_type = #tpu.core_type<tc>, window_params = [{transform_indices = @transform_0, window_bounds = array<i64: 1, 8, 128>}, {transform_indices = @transform_1, window_bounds = array<i64: 1, 8, 128>}]} {
    %0 = arith.index_cast %arg0 : i32 to index
    %1 = memref.load %arg2[%0] : memref<2xi32, #tpu.memory_space<smem>>
    %2 = arith.sitofp %1 : i32 to f32
    %c0 = arith.constant 0 : index
    %c0_0 = arith.constant 0 : index
    %c0_1 = arith.constant 0 : index
    %3 = vector.load %arg3[%c0, %c0_0, %c0_1] : memref<1x8x128xf32, #tpu.memory_space<vmem>>, vector<1x8x128xf32>
    %4 = vector.broadcast %2 : f32 to vector<1x8x128xf32>
    %5 = arith.mulf %3, %4 : vector<1x8x128xf32>
    %c0_2 = arith.constant 0 : index
    %c0_3 = arith.constant 0 : index
    %c0_4 = arith.constant 0 : index
    %6 = vector.load %arg4[%c0_2, %c0_3, %c0_4] : memref<1x8x128xf32, #tpu.memory_space<vmem>>, vector<1x8x128xf32>
    tpu.vector_store %arg4[%c0_2, %c0_3, %c0_4], %5 {strides = array<i32>} : memref<1x8x128xf32, #tpu.memory_space<vmem>>, vector<1x8x128xf32>,
    return
  }
  func.func @transform_0(%arg0: i32, %arg1: i32, %arg2: memref<2xi32, #tpu.memory_space<smem>>) -> (i32, i32, i32) {
    %c0_i32 = arith.constant 0 : i32
    %c0_i32_0 = arith.constant 0 : i32
    return %arg0, %arg1, %c0_i32 : i32, i32, i32
  }
  func.func @transform_1(%arg0: i32, %arg1: i32, %arg2: memref<2xi32, #tpu.memory_space<smem>>) -> (i32, i32, i32) {
    %c0_i32 = arith.constant 0 : i32
    %c0_i32_0 = arith.constant 0 : i32
    return %arg0, %arg1, %c0_i32 : i32, i32, i32
  }
}

</mosaic_0001>

<llo_original>
// kernel: tpu_custom_call.1
$region0: #{tpu_custom_call.1}
  #allocation0 [shape = 'u32[]', space=smem, size = 0x4, offset = 0x4, fixed_abs, tag = 'smem constant byte address 0x4 - core index']
  #allocation1 [shape = 'u32[144,128]{1,0:T(1,128)}', space=vmem, size = 0x12000, scoped, tag = 'internal scratch']
  #allocation2 [shape = 's32[1]{0}', space=sflag, size = 0x4, scoped, tag = 'scoped memory for tpu_custom_call.1']
  #allocation3 [shape = 'u8[512]{0}', space=smem, size = 0x200, scoped, tag = 'prefetched SMEM operand 0']
  %s0 = inlined_call_operand.hbm [shape: s32[2], index: 0, kind: input, shape index: {}]
  %s1 = inlined_call_operand.hbm [shape: f32[2,8,128], index: 1, kind: input, shape index: {}]
  %s2 = inlined_call_operand.hbm [shape: f32[2,8,128], index: 2, kind: output, shape index: {}]
  %s3 = sld [smem:[#allocation0]]
  $region41: #{tpu_custom_call.1} parent=0
    _
  %s5 = ssub.s32 1, %s3
  %s6 = scalar_select 0, %s5, %s3
  %8 = dma.hbm_to_smem %s0, 16, [#allocation3], [#allocation2]
  %9 = dma.done [#allocation2], 16
  %10 = sfence
  $region1: #{tpu_custom_call.1} parent=0
    #allocation4 [shape = 'u8[8192]{0}', space=vmem, size = 0x2000, scoped, tag = 'input window, operand 1']
    #allocation5 [shape = 's32[2]{0}', space=sflag, size = 0x8, scoped, tag = 'scoped memory for tpu_custom_call.1']
    #allocation6 [shape = 's32[2]{0}', space=sflag, size = 0x8, scoped, tag = 'scoped memory for tpu_custom_call.1']
    #allocation7 [shape = 'u8[8192]{0}', space=vmem, size = 0x2000, scoped, tag = 'output window, operand 0']
    %11 = vsyncpa [#allocation5], 0
    %s12 = scalar_lea.sflag [#allocation5], 1
    %13 = vsyncpa %s12, 0
    %14 = vsyncpa [#allocation6], 0
    %s15 = scalar_lea.sflag [#allocation6], 1
    %16 = vsyncpa %s15, 0
    loop: start=0, step=1, limit=4
    $region2: #{tpu_custom_call.1} parent=1 // loop_pre_header
      _
    $region3: #{tpu_custom_call.1} parent=1 // loop_header
      %s18 = sphi 0, %s22
      %p19 = scmp.ge.s32.totalorder %s18, 4
      %s25 = sphi 0, %s37
      %s26 = sphi 0, %s33
      %s27 = sphi 0, %s25
      %s28 = sphi 0, %s26
      %s29 = sphi 0, %s27
      %s30 = sphi 0, %s28
      %s42 = sphi 0, %s44
      %s45 = sphi 0, %s42
      %s46 = sphi 0, %s45
      %s62 = sphi 0, %s46
      %s70 = sphi 0, %s72
      %s73 = sphi 0, %s70
      %s74 = sphi 0, %s73
      %s90 = sphi 0, %s74
    $region4: #{tpu_custom_call.1} parent=1 // loop_header_branch
      %21 = sbr.rel (%p19) target = $region8
    $region5: #{tpu_custom_call.1} parent=1 // loop_body
      %s23 = ssub.s32 %s18, 1
      %s24 = ssub.s32 %s18, 2
      %s31 = sadd.s32 1, %s26
      %p32 = scmp.ge.s32.totalorder %s31, 1
      %s33 = scalar_select %p32, 0, %s31
      %s34 = sadd.s32 1, %s25
      %s35 = scalar_select %p32, %s34, %s25
      %p36 = scmp.ge.s32.totalorder %s35, 2
      %s37 = scalar_select %p36, 0, %s35
      %s38 = ssub.s32 %s25, %s37
      %s39 = ssub.s32 %s26, %s33
      %s40 = sor.u32 %s38, %s39
      %p41 = scmp.eq.s32.totalorder %s40, 0
      %s43 = sadd.s32 %s42, 1
      %s44 = scalar_select %p41, %s42, %s43
      %p47 = pneg %p41
      %p48 = scmp.eq.s32.totalorder %s18, 1
      %p49 = por %p47, %p48
      %p50 = scmp.ne.s32.totalorder %s42, %s45
      %p51 = scmp.eq.s32.totalorder %s18, 0
      %p52 = por %p50, %p51
      %p53 = scmp.ne.s32.totalorder %s42, %s45
      %p54 = scmp.eq.s32.totalorder %s23, 1
      %p55 = por %p53, %p54
      %p56 = scmp.ne.s32.totalorder %s45, %s46
      %p57 = scmp.eq.s32.totalorder %s23, 0
      %p58 = por %p56, %p57
      %p59 = scmp.ne.s32.totalorder %s45, %s46
      %p60 = scmp.eq.s32.totalorder %s24, 1
      %p61 = por %p59, %p60
      %p63 = scmp.ne.s32.totalorder %s46, %s62
      %p64 = scmp.eq.s32.totalorder %s24, 0
      %p65 = por %p63, %p64
      %s66 = ssub.s32 %s25, %s37
      %s67 = ssub.s32 %s26, %s33
      %s68 = sor.u32 %s66, %s67
      %p69 = scmp.eq.s32.totalorder %s68, 0
      %s71 = sadd.s32 %s70, 1
      %s72 = scalar_select %p69, %s70, %s71
      %p75 = pneg %p69
      %p76 = scmp.eq.s32.totalorder %s18, 1
      %p77 = por %p75, %p76
      %p78 = scmp.ne.s32.totalorder %s70, %s73
      %p79 = scmp.eq.s32.totalorder %s18, 0
      %p80 = por %p78, %p79
      %p81 = scmp.ne.s32.totalorder %s70, %s73
      %p82 = scmp.eq.s32.totalorder %s23, 1
      %p83 = por %p81, %p82
      %p84 = scmp.ne.s32.totalorder %s73, %s74
      %p85 = scmp.eq.s32.totalorder %s23, 0
      %p86 = por %p84, %p85
      %p87 = scmp.ne.s32.totalorder %s73, %s74
      %p88 = scmp.eq.s32.totalorder %s24, 1
      %p89 = por %p87, %p88
      %p91 = scmp.ne.s32.totalorder %s74, %s90
      %p92 = scmp.eq.s32.totalorder %s24, 0
      %p93 = por %p91, %p92
      %p94 = scmp.le.s32.totalorder 1, %s18
      %p95 = scmp.lt.s32.totalorder %s18, 3
      %p96 = pnand %p94, %p95
      %p97 = pneg %p96
      // Predicated region
      $region9: #{tpu_custom_call.1} parent=5 // pred_check
        _
      $region10: #{tpu_custom_call.1} parent=5 // pred_check_branch
        %99 = sbr.rel (%p96) target = $region12
      $region11: #{tpu_custom_call.1} parent=5 // pred_region
        %s100 = ssub.s32 %s18, 1
      $region12: #{tpu_custom_call.1} parent=5 // pred_fallthru
        _
      %p101 = scmp.lt.s32.totalorder %s18, 2
      // Predicated region
      $region13: #{tpu_custom_call.1} parent=5 // pred_check
        %p102 = pneg %p101
      $region14: #{tpu_custom_call.1} parent=5 // pred_check_branch
        %104 = sbr.rel (%p102) target = $region16
      $region15: #{tpu_custom_call.1} parent=5 // pred_region
        // Predicated region
        $region17: #{tpu_custom_call.1} parent=15 // pred_check
          %p105 = pneg %p52
        $region18: #{tpu_custom_call.1} parent=15 // pred_check_branch
          %107 = sbr.rel (%p105) target = $region20
        $region19: #{tpu_custom_call.1} parent=15 // pred_region
          %s108 = sand.u32 %s42, 1
          %s109 = scalar_lea.sflag [#allocation5], %s108
          %s110 = sand.u32 %s42, 1
          %s111 = smul.addr %s110, 8
          %s112 = scalar_lea.vmem [#allocation4], %s111
          %s114 = ssub.s32 128, 128
          %115 = vsyncadd %s109, %s114
          %s116 = sadd.s32 %s26, %s25
          %s117 = smul.addr %s116, 128
          %s118 = scalar_lea.hbm %s1, %s117
          %s120 = sshll.u32 %s112, 4
          %s121 = int_to_ptr.vmem [resolvable:$true] %s120
          %123 = dma.hbm_to_vmem [thread:$0]  %s118, 128, %s121, %s109
        $region20: #{tpu_custom_call.1} parent=15 // pred_fallthru
          _
      $region16: #{tpu_custom_call.1} parent=5 // pred_fallthru
        _
      %p124 = scmp.le.s32.totalorder 1, %s18
      %p125 = scmp.lt.s32.totalorder %s18, 3
      %p126 = pnand %p124, %p125
      %p127 = pneg %p126
      // Predicated region
      $region21: #{tpu_custom_call.1} parent=5 // pred_check
        _
      $region22: #{tpu_custom_call.1} parent=5 // pred_check_branch
        %129 = sbr.rel (%p126) target = $region24
      $region23: #{tpu_custom_call.1} parent=5 // pred_region
        %s130 = ssub.s32 %s18, 1
        %s131 = sand.u32 %s45, 1
        %s132 = scalar_lea.sflag [#allocation5], %s131
        %s133 = sand.u32 %s45, 1
        %s134 = smul.addr %s133, 8
        %s135 = scalar_lea.vmem [#allocation4], %s134
        // Predicated region
        $region25: #{tpu_custom_call.1} parent=23 // pred_check
          %p136 = pneg %p58
        $region26: #{tpu_custom_call.1} parent=23 // pred_check_branch
          %138 = sbr.rel (%p136) target = $region28
        $region27: #{tpu_custom_call.1} parent=23 // pred_region
          %139 = dma.done %s132, 128
        $region28: #{tpu_custom_call.1} parent=23 // pred_fallthru
          _
        %s140 = sand.u32 %s45, 1
        %s141 = scalar_lea.sflag [#allocation5], %s140
        %s142 = sand.u32 %s45, 1
        %s143 = smul.addr %s142, 8
        %s144 = scalar_lea.vmem [#allocation4], %s143
        %p145 = pneg %p58
        %p146 = pneg %p55
        %p147 = pneg %p86
        %p148 = pneg %p83
        %s149 = sand.u32 %s73, 1
        %s150 = scalar_lea.sflag [#allocation6], %s149
        %s151 = sand.u32 %s73, 1
        %s152 = smul.addr %s151, 8
        %s153 = scalar_lea.vmem [#allocation7], %s152
        %s154 = sld [smem:[#allocation3 + %s27]]
        %s155 = scvt.s32.f32 %s154
        %v156 = vld [vmem:[%s135] sm:$0xff]
        %v157 = vstv %s155
        %v158 = vmul.f32 %v156, %v157
        %159 = vst [vmem:[%s153] sm:$0xff] %v158
        %s160 = sand.u32 %s73, 1
        %s161 = scalar_lea.sflag [#allocation6], %s160
        %s162 = sand.u32 %s73, 1
        %s163 = smul.addr %s162, 8
        %s164 = scalar_lea.vmem [#allocation7], %s163
        // Predicated region
        $region29: #{tpu_custom_call.1} parent=23 // pred_check
          %p165 = pneg %p83
        $region30: #{tpu_custom_call.1} parent=23 // pred_check_branch
          %167 = sbr.rel (%p165) target = $region32
        $region31: #{tpu_custom_call.1} parent=23 // pred_region
          %s169 = ssub.s32 128, 128
          %170 = vsyncadd %s161, %s169
          %s171 = sadd.s32 %s28, %s27
          %s172 = smul.addr %s171, 128
          %s173 = scalar_lea.hbm %s2, %s172
          %s175 = sshll.u32 %s164, 4
          %s176 = int_to_ptr.vmem [resolvable:$true] %s175
          %178 = dma.vmem_to_hbm [thread:$0]  %s176, 128, %s173, %s161
        $region32: #{tpu_custom_call.1} parent=23 // pred_fallthru
          _
      $region24: #{tpu_custom_call.1} parent=5 // pred_fallthru
        _
      %p179 = scmp.le.s32.totalorder 2, %s18
      // Predicated region
      $region33: #{tpu_custom_call.1} parent=5 // pred_check
        %p180 = pneg %p179
      $region34: #{tpu_custom_call.1} parent=5 // pred_check_branch
        %182 = sbr.rel (%p180) target = $region36
      $region35: #{tpu_custom_call.1} parent=5 // pred_region
        %s183 = ssub.s32 %s18, 2
        // Predicated region
        $region37: #{tpu_custom_call.1} parent=35 // pred_check
          %p184 = pneg %p89
        $region38: #{tpu_custom_call.1} parent=35 // pred_check_branch
          %186 = sbr.rel (%p184) target = $region40
        $region39: #{tpu_custom_call.1} parent=35 // pred_region
          %s187 = sand.u32 %s74, 1
          %s188 = scalar_lea.sflag [#allocation6], %s187
          %s189 = sand.u32 %s74, 1
          %s190 = smul.addr %s189, 8
          %s191 = scalar_lea.vmem [#allocation7], %s190
          %192 = dma.done %s188, 128
        $region40: #{tpu_custom_call.1} parent=35 // pred_fallthru
          _
      $region36: #{tpu_custom_call.1} parent=5 // pred_fallthru
        _
    $region6: #{tpu_custom_call.1} parent=1 // loop_footer
      %s22 = sadd.s32 1, %s18
    $region7: #{tpu_custom_call.1} parent=1 // loop_footer_branch
      %17 = sbr.rel target = $region3
    $region8: #{tpu_custom_call.1} parent=1 // loop_exit
      _
    %193 = vsyncpa [#allocation5], 1
    %s194 = scalar_lea.sflag [#allocation5], 1
    %195 = vsyncpa %s194, 1
    %196 = vsyncpa [#allocation6], 1
    %s197 = scalar_lea.sflag [#allocation6], 1
    %198 = vsyncpa %s197, 1

</llo_original>
